<compile_context>
chip_gen: v7x
topology: tpu7x:2x2x1
jax: 0.10.0
libtpu: 0.0.40
codegen_flags: <defaults>
</compile_context>

<pallas_src>
import jax
import jax.numpy as jnp
from jax import lax
from jax.experimental import pallas as pl
from jax.experimental.pallas import tpu as pltpu


def _round_up(x, m):
    return ((x + m - 1) // m) * m


def _self_output_kernel(x_ref, w_ref, b_ref, o_ref):
    # x_ref: [TM, H_in]  (one token tile)
    # w_ref: [H_out, H_in]  (PyTorch nn.Linear layout, resident across tiles)
    # b_ref: [1, H_out]
    # o_ref: [TM, H_out]
    x = x_ref[...]
    w = w_ref[...]
    # y = x @ w.T on the MXU: contract x dim 1 with w dim 1 (no transpose in HBM).
    y = lax.dot_general(
        x, w,
        dimension_numbers=(((1,), (1,)), ((), ())),
        preferred_element_type=jnp.float32,
    )
    y = y + b_ref[...].astype(jnp.float32)
    o_ref[...] = y.astype(o_ref.dtype)


def albert_self_output(hidden_states, input_tensor, weight, bias,
                       dropout_prob=0.0, training=False):
    """Pallas implementation of AlbertSelfOutput.forward.

    hidden_states: [B, S, H] float32
    input_tensor:  [B, S, H] (unused by the reference forward)
    weight:        [H_out, H_in]  (PyTorch nn.Linear convention)
    bias:          [H_out]
    """
    del input_tensor  # reference forward never uses it
    B, S, H = hidden_states.shape
    T = B * S
    dtype = hidden_states.dtype
    itemsize = jnp.dtype(dtype).itemsize

    # Token tile: multiple of 8 (sublane), up to 512 to amortize per-step
    # overhead while keeping the live VMEM set small.
    TM = min(512, _round_up(T, 8))
    T_pad = _round_up(T, TM)

    x2d = hidden_states.reshape(T, H)
    if T_pad != T:
        x2d = jnp.pad(x2d, ((0, T_pad - T), (0, 0)))
    b2d = bias.reshape(1, H)

    grid = (T_pad // TM,)

    # Scoped-VMEM budget: double-buffered x/out tiles + resident weight + bias
    # (double-buffered by default), with 2x headroom, capped at v7x's 64 MiB.
    vmem_need = (2 * 2 * TM * H + 2 * H * H + 2 * H) * itemsize
    vmem_limit = int(min(max(2 * vmem_need, 32 * 1024 * 1024),
                         64 * 1024 * 1024))

    cost = pl.CostEstimate(
        flops=2 * T_pad * H * H,
        transcendentals=0,
        bytes_accessed=(2 * T_pad * H + H * H + H) * itemsize,
    )

    out2d = pl.pallas_call(
        _self_output_kernel,
        out_shape=jax.ShapeDtypeStruct((T_pad, H), dtype),
        grid_spec=pltpu.PrefetchScalarGridSpec(
            num_scalar_prefetch=0,
            grid=grid,
            in_specs=[
                # x: tiled along tokens, pipelined.
                pl.BlockSpec((TM, H), lambda i: (i, 0)),
                # weight: constant index_map -> fetched once, stays resident.
                pl.BlockSpec((H, H), lambda i: (0, 0)),
                # bias: constant index_map -> resident.
                pl.BlockSpec((1, H), lambda i: (0, 0)),
            ],
            out_specs=pl.BlockSpec((TM, H), lambda i: (i, 0)),
        ),
        compiler_params=pltpu.CompilerParams(
            # Token tiles are independent -> shard across TCs on v7x megacore.
            dimension_semantics=("parallel",),
            vmem_limit_bytes=vmem_limit,
        ),
        cost_estimate=cost,
    )(x2d, weight, b2d)

    if T_pad != T:
        out2d = out2d[:T]

    # Dropout: identity in eval mode (p has no effect); see TODO above.
    return out2d.reshape(B, S, H)


if __name__ == "__main__":
    # Small config: batch=2, seq=8, hidden=32
    B, S, H = 2, 8, 32
    key = jax.random.PRNGKey(0)
    k_x, k_in, k_w, k_b = jax.random.split(key, 4)

    hidden_states = jax.random.normal(k_x, (B, S, H), dtype=jnp.float32)
    input_tensor = jax.random.normal(k_in, (B, S, H), dtype=jnp.float32)

    # Deterministic "parameters" (synthetic init, like nn.Linear(H, H))
    weight = jax.random.normal(k_w, (H, H), dtype=jnp.float32) * (1.0 / jnp.sqrt(H))
    bias = jax.random.normal(k_b, (H,), dtype=jnp.float32) * 0.02

    out = albert_self_output(hidden_states, input_tensor, weight, bias,
                             dropout_prob=0.1, training=False)
    out = jax.block_until_ready(out)

    # Reference check in plain JAX (dense + eval-mode dropout == identity)
    ref = hidden_states.reshape(B * S, H) @ weight.T + bias
    ref = ref.reshape(B, S, H)
    assert jnp.allclose(out, ref, atol=1e-5, rtol=1e-5), "mismatch vs reference"

    print("KERNEL_OK")
</pallas_src>

<mosaic_0001>
module attributes {stable_mosaic.version = 11 : i64} {
  func.func @_self_output_kernel(%arg0: i32, %arg1: memref<16x32xf32, #tpu.memory_space<vmem>>, %arg2: memref<32x32xf32, #tpu.memory_space<vmem>>, %arg3: memref<1x32xf32, #tpu.memory_space<vmem>>, %arg4: memref<16x32xf32, #tpu.memory_space<vmem>>) attributes {dimension_semantics = [#tpu.dimension_semantics<parallel>], iteration_bounds = array<i64: 1>, scalar_prefetch = 0 : i64, scratch_operands = 0 : i64, tpu.core_type = #tpu.core_type<tc>, window_params = [{transform_indices = @transform_0, window_bounds = array<i64: 16, 32>}, {pipeline_mode = #tpu.pipeline_mode<synchronous>, transform_indices = @transform_1, window_bounds = array<i64: 32, 32>}, {pipeline_mode = #tpu.pipeline_mode<synchronous>, transform_indices = @transform_2, window_bounds = array<i64: 1, 32>}, {transform_indices = @transform_3, window_bounds = array<i64: 16, 32>}]} {
    %c0 = arith.constant 0 : index
    %c0_0 = arith.constant 0 : index
    %0 = vector.load %arg1[%c0, %c0_0] : memref<16x32xf32, #tpu.memory_space<vmem>>, vector<16x32xf32>
    %c0_1 = arith.constant 0 : index
    %c0_2 = arith.constant 0 : index
    %1 = vector.load %arg2[%c0_1, %c0_2] : memref<32x32xf32, #tpu.memory_space<vmem>>, vector<32x32xf32>
    %cst = arith.constant dense<0.000000e+00> : vector<16x32xf32>
    %2 = tpu.matmul %0, %1, %cst {dimension_numbers = #tpu.dot_dimension_numbers<[1], [1], [0], [0], [0, 0, 1, 0], [], []>} : vector<16x32xf32>, vector<32x32xf32>, vector<16x32xf32> -> vector<16x32xf32>
    %c0_3 = arith.constant 0 : index
    %c0_4 = arith.constant 0 : index
    %3 = vector.load %arg3[%c0_3, %c0_4] : memref<1x32xf32, #tpu.memory_space<vmem>>, vector<1x32xf32>
    %4 = vector.broadcast %3 : vector<1x32xf32> to vector<16x32xf32>
    %5 = arith.addf %2, %4 : vector<16x32xf32>
    %c0_5 = arith.constant 0 : index
    %c0_6 = arith.constant 0 : index
    %6 = vector.load %arg4[%c0_5, %c0_6] : memref<16x32xf32, #tpu.memory_space<vmem>>, vector<16x32xf32>
    tpu.vector_store %arg4[%c0_5, %c0_6], %5 {strides = array<i32>} : memref<16x32xf32, #tpu.memory_space<vmem>>, vector<16x32xf32>,
    return
  }
  func.func @transform_0(%arg0: i32) -> (i32, i32) {
    %c0_i32 = arith.constant 0 : i32
    %c0_i32_0 = arith.constant 0 : i32
    return %arg0, %c0_i32 : i32, i32
  }
  func.func @transform_1(%arg0: i32) -> (i32, i32) {
    %c0_i32 = arith.constant 0 : i32
    %c0_i32_0 = arith.constant 0 : i32
    %c0_i32_1 = arith.constant 0 : i32
    return %c0_i32, %c0_i32_0 : i32, i32
  }
  func.func @transform_2(%arg0: i32) -> (i32, i32) {
    %c0_i32 = arith.constant 0 : i32
    %c0_i32_0 = arith.constant 0 : i32
    %c0_i32_1 = arith.constant 0 : i32
    return %c0_i32, %c0_i32_0 : i32, i32
  }
  func.func @transform_3(%arg0: i32) -> (i32, i32) {
    %c0_i32 = arith.constant 0 : i32
    %c0_i32_0 = arith.constant 0 : i32
    return %arg0, %c0_i32 : i32, i32
  }
}

</mosaic_0001>

<llo_original>
// kernel: tpu_custom_call.1
$region0: #{tpu_custom_call.1}
  #allocation0 [shape = 'u32[]', space=smem, size = 0x4, offset = 0x4, fixed_abs, tag = 'smem constant byte address 0x4 - core index']
  #allocation1 [shape = 'u32[144,128]{1,0:T(1,128)}', space=vmem, size = 0x12000, scoped, tag = 'internal scratch']
  %s0 = inlined_call_operand.hbm [shape: f32[16,32], index: 0, kind: input, shape index: {}]
  %s1 = inlined_call_operand.hbm [shape: f32[32,32], index: 1, kind: input, shape index: {}]
  %s2 = inlined_call_operand.vmem [shape: f32[1,32], index: 2, kind: input, shape index: {}]
  %s3 = inlined_call_operand.hbm [shape: f32[16,32], index: 3, kind: output, shape index: {}]
  %s4 = sld [smem:[#allocation0]]
  $region30: #{tpu_custom_call.1} parent=0
    _
  %s6 = ssub.s32 1, %s4
  %s7 = scalar_select 0, %s6, %s4
  $region1: #{tpu_custom_call.1} parent=0
    #allocation2 [shape = 'u8[8192]{0}', space=vmem, size = 0x2000, scoped, tag = 'input window, operand 0, single buffered']
    #allocation3 [shape = 's32[1]{0}', space=sflag, size = 0x4, scoped, tag = 'scoped memory for tpu_custom_call.1']
    #allocation4 [shape = 's32[1]{0}', space=sflag, size = 0x4, scoped, tag = 'scoped memory for tpu_custom_call.1']
    #allocation5 [shape = 'u8[16384]{0}', space=vmem, size = 0x4000, scoped, tag = 'input window, operand 1, single buffered']
    #allocation6 [shape = 's32[1]{0}', space=sflag, size = 0x4, scoped, tag = 'scoped memory for tpu_custom_call.1']
    #allocation7 [shape = 'u8[8192]{0}', space=vmem, size = 0x2000, scoped, tag = 'output window, operand 0, single buffered']
    %8 = vsyncpa [#allocation3], 0
    %9 = vsyncpa [#allocation6], 0
    %10 = vsyncpa [#allocation4], 0
    // Predicated region
    $region2: #{tpu_custom_call.1} parent=1 // pred_check
      _
    $region3: #{tpu_custom_call.1} parent=1 // pred_check_branch
      %12 = sbr.rel (0) target = $region5
    $region4: #{tpu_custom_call.1} parent=1 // pred_region
      %s14 = ssub.s32 256, 256
      %15 = vsyncadd [#allocation3], %s14
      %s16 = sshll.u32 [#allocation2], 4
      %s17 = int_to_ptr.vmem [resolvable:$true] %s16
      %22 = dma.hbm_to_vmem [thread:$0]  %s0, 256, %s17, [#allocation3], 128, 128, 8
    $region5: #{tpu_custom_call.1} parent=1 // pred_fallthru
      _
    // Predicated region
    $region6: #{tpu_custom_call.1} parent=1 // pred_check
      _
    $region7: #{tpu_custom_call.1} parent=1 // pred_check_branch
      %24 = sbr.rel (0) target = $region9
    $region8: #{tpu_custom_call.1} parent=1 // pred_region
      %s26 = ssub.s32 512, 512
      %27 = vsyncadd [#allocation6], %s26
      %s28 = sshll.u32 [#allocation5], 4
      %s29 = int_to_ptr.vmem [resolvable:$true] %s28
      %34 = dma.hbm_to_vmem [thread:$0]  %s1, 512, %s29, [#allocation6], 128, 128, 8
    $region9: #{tpu_custom_call.1} parent=1 // pred_fallthru
      _
    // Predicated region
    $region10: #{tpu_custom_call.1} parent=1 // pred_check
      _
    $region11: #{tpu_custom_call.1} parent=1 // pred_check_branch
      %36 = sbr.rel (0) target = $region13
    $region12: #{tpu_custom_call.1} parent=1 // pred_region
      _
    $region13: #{tpu_custom_call.1} parent=1 // pred_fallthru
      _
    // Predicated region
    $region14: #{tpu_custom_call.1} parent=1 // pred_check
      _
    $region15: #{tpu_custom_call.1} parent=1 // pred_check_branch
      %38 = sbr.rel (0) target = $region17
    $region16: #{tpu_custom_call.1} parent=1 // pred_region
      %39 = dma.done [#allocation3], 256
    $region17: #{tpu_custom_call.1} parent=1 // pred_fallthru
      _
    // Predicated region
    $region18: #{tpu_custom_call.1} parent=1 // pred_check
      _
    $region19: #{tpu_custom_call.1} parent=1 // pred_check_branch
      %41 = sbr.rel (0) target = $region21
    $region20: #{tpu_custom_call.1} parent=1 // pred_region
      %42 = dma.done [#allocation6], 512
    $region21: #{tpu_custom_call.1} parent=1 // pred_fallthru
      _
    %v43 = vld [vmem:[#allocation2] sm:$0xff]
    %v44 = vld [vmem:[#allocation2 + $0x8] sm:$0xff]
    %v45 = vld [vmem:[#allocation5] sm:$0xff]
    %v46 = vld [vmem:[#allocation5 + $0x8] sm:$0xff]
    %v47 = vld [vmem:[#allocation5 + $0x10] sm:$0xff]
    %v48 = vld [vmem:[#allocation5 + $0x18] sm:$0xff]
    %v49 = vld [vmem:[%s2] sm:$0x1]
    %v51 = vlaneseq
    %v52 = vshrl.u32 %v51, 7
    %v53 = vsub.s32 0, %v52
    %v54 = vrot.slane %v49, %v53
    %vm56 = vcmask 261120
    %v58 = vsel %vm56, %v43, 0
    %v61 = vsel %vm56, %v44, 0
    %v64 = vsel %vm56, %v45, 0
    %v67 = vsel %vm56, %v46, 0
    %v70 = vsel %vm56, %v47, 0
    %v73 = vsel %vm56, %v48, 0
    %75 = vmatprep.subr.mxu0 0.0
    %76 = vmatpush1.xpose.msra.mxu0 %v64
    %77 = vmatprep.subr.mxu0 0.0
    %78 = vmatpush1.xpose.msra.mxu0 %v67
    %79 = vmatprep.subr.mxu0 0.0
    %80 = vmatpush1.xpose.msra.mxu0 %v70
    %81 = vmatprep.subr.mxu0 0.0
    %82 = vmatpush1.xpose.msra.mxu0 %v73
    %83 = vmatprep.subr.mxu0 0.0
    %84 = vmatpush1.xpose.msra.mxu0 0.0
    %85 = vmatprep.subr.mxu0 0.0
    %86 = vmatpush1.xpose.msra.mxu0 0.0
    %87 = vmatprep.subr.mxu0 0.0
    %88 = vmatpush1.xpose.msra.mxu0 0.0
    %89 = vmatprep.subr.mxu0 0.0
    %90 = vmatpush1.xpose.msra.mxu0 0.0
    %91 = vmatprep.subr.mxu0 0.0
    %92 = vmatpush1.xpose.msra.mxu0 0.0
    %93 = vmatprep.subr.mxu0 0.0
    %94 = vmatpush1.xpose.msra.mxu0 0.0
    %95 = vmatprep.subr.mxu0 0.0
    %96 = vmatpush1.xpose.msra.mxu0 0.0
    %97 = vmatprep.subr.mxu0 0.0
    %98 = vmatpush1.xpose.msra.mxu0 0.0
    %99 = vmatprep.subr.mxu0 0.0
    %100 = vmatpush1.xpose.msra.mxu0 0.0
    %101 = vmatprep.subr.mxu0 0.0
    %102 = vmatpush1.xpose.msra.mxu0 0.0
    %103 = vmatprep.subr.mxu0 0.0
    %104 = vmatpush1.xpose.msra.mxu0 0.0
    %105 = vmatprep.subr.mxu0 0.0
    %106 = vmatpush1.xpose.msra.mxu0 0.0
    %107 = vmatprep.subr.mxu0 0.0
    %108 = vmatpush1.xpose.msra.mxu0 0.0
    %109 = vmatprep.subr.mxu0 0.0
    %110 = vmatpush1.xpose.msra.mxu0 0.0
    %111 = vmatprep.subr.mxu0 0.0
    %112 = vmatpush1.xpose.msra.mxu0 0.0
    %113 = vmatprep.subr.mxu0 0.0
    %114 = vmatpush1.xpose.msra.mxu0 0.0
    %115 = vmatprep.subr.mxu0 0.0
    %116 = vmatpush1.xpose.msra.mxu0 0.0
    %117 = vmatprep.subr.mxu0 0.0
    %118 = vmatpush1.xpose.msra.mxu0 0.0
    %119 = vmatprep.subr.mxu0 0.0
    %120 = vmatpush1.xpose.msra.mxu0 0.0
    %121 = vmatprep.subr.mxu0 0.0
    %122 = vmatpush1.xpose.msra.mxu0 0.0
    %123 = vmatprep.subr.mxu0 0.0
    %124 = vmatpush1.xpose.msra.mxu0 0.0
    %125 = vmatprep.subr.mxu0 0.0
    %126 = vmatpush1.xpose.msra.mxu0 0.0
    %127 = vmatprep.subr.mxu0 0.0
    %128 = vmatpush1.xpose.msra.mxu0 0.0
    %129 = vmatprep.subr.mxu0 0.0
    %130 = vmatpush1.xpose.msra.mxu0 0.0
    %131 = vmatprep.subr.mxu0 0.0
    %132 = vmatpush1.xpose.msra.mxu0 0.0
    %133 = vmatprep.subr.mxu0 0.0
    %134 = vmatpush1.xpose.msra.mxu0 0.0
    %135 = vmatprep.subr.mxu0 0.0
    %136 = vmatpush1.xpose.msra.mxu0 0.0
    %137 = vmatprep.subr.mxu0 0.0
    %138 = vmatpush1.xpose.msra.mxu0 0.0
    %139 = vmatprep.mubr.f32.mxu0 0.0
    %140 = vmatmul.mubr.f32.gmra.mrb[0].mxu0 %v58
    %v141 = vpop.f32.mrb[0].mxu0
    %v142 = vadd.f32 %v54, %v141
    %v143 = vpop.f32.mrb[0].mxu0
    %144 = vmatprep.mubr.f32.mxu0 0.0
    %145 = vmatmul.mubr.f32.gmra.mrb[0].mxu0 %v61
    %v146 = vpop.f32.mrb[0].mxu0
    %v147 = vadd.f32 %v54, %v146
    %v148 = vpop.f32.mrb[0].mxu0
    %149 = vdwg.mxu0
    %150 = vst.msk [vmem:[#allocation7] sm:$0xff] %vm56, %v142
    %151 = vst.msk [vmem:[#allocation7 + $0x8] sm:$0xff] %vm56, %v147
    // Predicated region
    $region22: #{tpu_custom_call.1} parent=1 // pred_check
      _
    $region23: #{tpu_custom_call.1} parent=1 // pred_check_branch
      %153 = sbr.rel (0) target = $region25
    $region24: #{tpu_custom_call.1} parent=1 // pred_region
      %s155 = ssub.s32 256, 256
      %156 = vsyncadd [#allocation4], %s155
      %s157 = sshll.u32 [#allocation7], 4
      %s158 = int_to_ptr.vmem [resolvable:$true] %s157
      %163 = dma.vmem_to_hbm [thread:$0]  %s158, 256, %s3, [#allocation4], 128, 128, 8
    $region25: #{tpu_custom_call.1} parent=1 // pred_fallthru
      _
    // Predicated region
    $region26: #{tpu_custom_call.1} parent=1 // pred_check
      _
    $region27: #{tpu_custom_call.1} parent=1 // pred_check_branch
      %165 = sbr.rel (0) target = $region29
    $region28: #{tpu_custom_call.1} parent=1 // pred_region
      %166 = dma.done [#allocation4], 256
    $region29: #{tpu_custom_call.1} parent=1 // pred_fallthru
      _
    %167 = vsyncpa [#allocation3], 1
    %168 = vsyncpa [#allocation6], 1
    %169 = vsyncpa [#allocation4], 1

</llo_original>
